<compile_context>
chip_gen: v5e
topology: v5e:2x2
jax: 0.10.0
libtpu: 0.0.40
codegen_flags: <defaults>
</compile_context>

<pallas_src>
import functools
import math

import jax
import jax.numpy as jnp
from jax.experimental import pallas as pl
from jax.experimental.pallas import tpu as pltpu

# Large finite negative mask value: avoids (-inf) - (-inf) = NaN paths.
_MASK_VALUE = -1e30


# ----------------------------------------------------------------------------
# Small helpers
# ----------------------------------------------------------------------------
def _round_up(x, m):
    return ((x + m - 1) // m) * m


def _filter_candidates(cands, min_block):
    return tuple(c for c in cands if c >= min_block)


def _choose_block(n, candidates, max_pad_frac=0.125):
    """Largest candidate (descending) that divides n or pads n by at most
    max_pad_frac; falls back to a full-dim block for small/awkward n."""
    for c in candidates:
        if c > n:
            continue
        padded = _round_up(n, c)
        if padded == n or (padded - n) <= max_pad_frac * n:
            return c, padded
    return n, n


def _pick_divisor(n, candidates, default):
    for c in candidates:
        if c <= n and n % c == 0:
            return c
    return default


def _vmem_capacity_bytes():
    """Per-core VMEM capacity (generation aware), conservative fallback."""
    try:
        cap = getattr(pltpu.get_tpu_info(), "vmem_capacity_bytes", None)
        if cap:
            return int(cap)
    except Exception:
        pass
    return 64 * 2**20          # v7x per-TensorCore size: safe lower bound


def _clamp_vmem(estimate_bytes, capacity_bytes):
    """Scoped-VMEM limit: 2x headroom over estimate, <= ~85% of physical."""
    cap = max(int(0.85 * capacity_bytes), 16 * 2**20)
    return int(min(max(2 * estimate_bytes, 32 * 2**20), cap))


# ----------------------------------------------------------------------------
# Kernel 1: QKV projection (scale pre-folded into the Q weight columns).
# ----------------------------------------------------------------------------
def _qkv_proj_kernel(x_ref, w_ref, b_ref, o_ref):
    acc = jnp.dot(x_ref[...], w_ref[...], preferred_element_type=jnp.float32)
    o_ref[...] = (acc + b_ref[0]).astype(o_ref.dtype)


# ----------------------------------------------------------------------------
# Kernel 2: flash-style causal attention (batched heads) + output projection.
# ----------------------------------------------------------------------------
def _flash_attn_proj_kernel(q_ref, k_ref, v_ref, wp_ref, bp_ref, o_ref,
                            m_sc, l_sc, acc_sc, *, blk_q, blk_k):
    qi = pl.program_id(1)
    ki = pl.program_id(2)

    @pl.when(ki == 0)
    def _init():
        m_sc[...] = jnp.full(m_sc.shape, -jnp.inf, dtype=m_sc.dtype)
        l_sc[...] = jnp.zeros(l_sc.shape, dtype=l_sc.dtype)
        acc_sc[...] = jnp.zeros(acc_sc.shape, dtype=acc_sc.dtype)

    q_start = qi * blk_q
    k_start = ki * blk_k

    # Skip kv blocks lying entirely above the causal diagonal (their DMA was
    # already avoided by the clamped kv index_map in the wrapper).
    @pl.when(k_start < q_start + blk_q)
    def _compute():
        q = q_ref[0]                                         # (H, blk_q, hs)
        k = k_ref[0]                                         # (H, blk_k, hs)
        v = v_ref[0]                                         # (H, blk_k, hs)

        # Batched-head QK^T (shared by both mask branches).
        s = jnp.einsum('hqd,hkd->hqk', q, k,
                       preferred_element_type=jnp.float32)   # (H, bq, bk) f32

        def _accumulate(scores):
            # Online softmax with f32 statistics.
            m_prev = m_sc[...]
            m_new = jnp.maximum(m_prev,
                                jnp.max(scores, axis=-1, keepdims=True))
            alpha = jnp.exp(m_prev - m_new)
            # TODO(synk): on v6e/v7x the EUP may be the binding slot; a bf16
            # exp (keeping l/acc in f32) is ~2x faster there if accuracy holds.
            p = jnp.exp(scores - m_new)
            l_sc[...] = alpha * l_sc[...] + jnp.sum(p, axis=-1, keepdims=True)
            acc_sc[...] = alpha * acc_sc[...] + jnp.einsum(
                'hqk,hkd->hqd', p.astype(v.dtype), v,
                preferred_element_type=jnp.float32)
            m_sc[...] = m_new

        # Build the causal mask only for blocks that straddle the diagonal.
        needs_mask = (k_start + blk_k) > (q_start + 1)

        @pl.when(needs_mask)
        def _masked():
            row = q_start + jax.lax.broadcasted_iota(jnp.int32, s.shape, 1)
            col = k_start + jax.lax.broadcasted_iota(jnp.int32, s.shape, 2)
            _accumulate(jnp.where(row >= col, s, _MASK_VALUE))

        @pl.when(jnp.logical_not(needs_mask))
        def _unmasked():
            _accumulate(s)

    @pl.when(ki == pl.num_programs(2) - 1)
    def _finalize():
        # Normalize the (H, bq, hs) accumulator (EUP reciprocal), merge heads
        # into a lane-dense (bq, C) tile and do a single (bq,C)@(C,C) matmul.
        inv_l = pl.reciprocal(l_sc[...], approx=True)        # (H, bq, 1)
        attn = acc_sc[...] * inv_l                           # (H, bq, hs) f32
        attn = jnp.transpose(attn, (1, 0, 2)).reshape(blk_q, -1)   # (bq, C)
        out = jnp.dot(attn.astype(wp_ref.dtype), wp_ref[...],
                      preferred_element_type=jnp.float32) + bp_ref[0]
        o_ref[0] = out.astype(o_ref.dtype)


# ----------------------------------------------------------------------------
# Wrapper
# ----------------------------------------------------------------------------
def multi_head_attention(x, w_qkv_t, b_qkv, w_proj_t, b_proj, *, n_head):
    """x: (B, T, C).  w_qkv_t: (C, 3C).  b_qkv: (1, 3C).  w_proj_t: (C, C).
    b_proj: (1, C).  Returns (B, T, C).  Pass bf16 arrays for the bf16 MXU
    path (softmax statistics stay f32 inside the kernel)."""
    B, T, C = x.shape
    assert C % n_head == 0
    hs = C // n_head
    itemsize = jnp.dtype(x.dtype).itemsize
    min_blk = 16 if itemsize < 4 else 8              # bf16 sublane packing
    capacity = _vmem_capacity_bytes()
    budget = int(0.8 * capacity)

    # Fold 1/sqrt(hs) into the Q columns of the QKV weight/bias once.
    q_scale = 1.0 / math.sqrt(hs)
    col_scale = jnp.concatenate([jnp.full((C,), q_scale, jnp.float32),
                                 jnp.ones((2 * C,), jnp.float32)])
    w_qkv_t = (w_qkv_t.astype(jnp.float32) * col_scale[None, :]).astype(w_qkv_t.dtype)
    b_qkv = (b_qkv.astype(jnp.float32) * col_scale[None, :]).astype(b_qkv.dtype)

    # ---- Kernel 1: QKV projection over flattened (B*T) rows ----------------
    rows = B * T
    blk_r, rows_pad = _choose_block(
        rows, _filter_candidates((512, 256, 128, 64, 32, 16, 8), min_blk))

    def vmem1_est(br, bn):
        bn_l = _round_up(bn, 128)
        return ((2 * br * _round_up(C, 128)        # x   (double-buffered)
                 + 2 * C * bn_l                    # W   block
                 + 2 * 8 * bn_l                    # bias block
                 + 2 * br * bn_l) * itemsize       # output block
                + br * bn_l * 4)                   # f32 matmul transient

    # Keep the full (C, 3C) weight resident when it fits (v5e/v6e); block the
    # 3C output columns when it does not (v7x / wide models).
    blk_n = 3 * C
    if vmem1_est(blk_r, blk_n) > budget:
        blk_n = _pick_divisor(3 * C, (1536, 1024, 512, 256, 128), default=3 * C)
    while (vmem1_est(blk_r, blk_n) > budget and blk_n % 2 == 0 and blk_n > 128
           and (3 * C) % (blk_n // 2) == 0):
        blk_n //= 2
    while (vmem1_est(blk_r, blk_n) > budget and blk_r % 2 == 0 and blk_r > min_blk
           and rows_pad % (blk_r // 2) == 0):
        blk_r //= 2

    x_flat = x.reshape(rows, C)
    if rows_pad > rows:
        x_flat = jnp.pad(x_flat, ((0, rows_pad - rows), (0, 0)))

    # Column blocks are the OUTER grid axis so each weight tile streams from
    # HBM once while the row blocks cycle underneath it.
    qkv = pl.pallas_call(
        _qkv_proj_kernel,
        out_shape=jax.ShapeDtypeStruct((rows_pad, 3 * C), x.dtype),
        grid_spec=pltpu.PrefetchScalarGridSpec(
            num_scalar_prefetch=0,
            grid=((3 * C) // blk_n, rows_pad // blk_r),
            in_specs=[
                pl.BlockSpec((blk_r, C), lambda n, r: (r, 0)),       # x rows
                pl.BlockSpec((C, blk_n), lambda n, r: (0, n)),       # W_qkv^T
                pl.BlockSpec((1, blk_n), lambda n, r: (0, n)),       # b_qkv
            ],
            out_specs=pl.BlockSpec((blk_r, blk_n), lambda n, r: (r, n)),
        ),
        compiler_params=pltpu.CompilerParams(
            dimension_semantics=("parallel", "parallel"),
            vmem_limit_bytes=_clamp_vmem(vmem1_est(blk_r, blk_n), capacity)),
    )(x_flat, w_qkv_t, b_qkv)
    if rows_pad > rows:
        qkv = qkv[:rows]

    # Head-major layout plumbing (XLA reshape/transpose).
    # TODO(synk): fuse this relayout into kernel 1 (head-major q/k/v outputs)
    # to save the ~3*B*T*C HBM round trip (matters most on v5e bandwidth).
    qkv = qkv.reshape(B, T, 3, n_head, hs).transpose(2, 0, 3, 1, 4)
    q, k, v = qkv[0], qkv[1], qkv[2]                          # (B, H, T, hs)

    # ---- Kernel 2: flash attention + fused output projection ---------------
    big_vmem = capacity >= 96 * 2**20                         # v5e/v6e 128 MiB
    q_cands = ((1024, 512, 256, 128, 64, 32, 16, 8) if big_vmem
               else (512, 256, 128, 64, 32, 16, 8))
    blk_q, T_pad = _choose_block(T, _filter_candidates(q_cands, min_blk))
    blk_k = _pick_divisor(T_pad,
                          _filter_candidates((256, 128, 64, 32, 16, 8), min_blk),
                          default=T_pad)

    def vmem2_est(bq, bk):
        hs_l = _round_up(hs, 128)
        c_l = _round_up(C, 128)
        est = 2 * n_head * bq * hs_l * itemsize               # q (dbl-buffered)
        est += 2 * 2 * n_head * bk * hs_l * itemsize          # k, v
        est += 2 * (C * c_l + 8 * c_l) * itemsize             # W_proj, b_proj
        est += 2 * bq * c_l * itemsize                        # output block
        est += n_head * bq * (2 * 128 + hs_l) * 4             # m, l, acc (f32)
        est += n_head * bq * _round_up(bk, 128) * 4           # scores transient
        est += bq * c_l * 4                                   # proj transient
        return est

    while (vmem2_est(blk_q, blk_k) > budget and blk_q % 2 == 0 and blk_q > 128
           and T_pad % (blk_q // 2) == 0):
        blk_q //= 2
    while (vmem2_est(blk_q, blk_k) > budget and blk_k % 2 == 0 and blk_k > 128
           and T_pad % (blk_k // 2) == 0):
        blk_k //= 2

    if T_pad > T:
        pad = ((0, 0), (0, 0), (0, T_pad - T), (0, 0))
        q, k, v = jnp.pad(q, pad), jnp.pad(k, pad), jnp.pad(v, pad)

    def kv_index(b, i, j):
        # Clamp fully-masked kv blocks to the last causal block so their DMA
        # is skipped (same block index -> no copy); compute skip is in-kernel.
        j_max = ((i + 1) * blk_q - 1) // blk_k
        return (b, 0, jnp.minimum(j, j_max), 0)

    def run_attention(single_buffer_weights):
        def const_spec(shape):
            if single_buffer_weights:
                return pl.BlockSpec(shape, lambda b, i, j: (0, 0),
                                    pipeline_mode=pl.Buffered(1))
            return pl.BlockSpec(shape, lambda b, i, j: (0, 0))

        # NOTE(v7x megacore): keep B * (T_pad//blk_q) even when possible so
        # both TensorCores get equal work along the parallel axes.
        return pl.pallas_call(
            functools.partial(_flash_attn_proj_kernel, blk_q=blk_q, blk_k=blk_k),
            out_shape=jax.ShapeDtypeStruct((B, T_pad, C), x.dtype),
            grid_spec=pltpu.PrefetchScalarGridSpec(
                num_scalar_prefetch=0,
                grid=(B, T_pad // blk_q, T_pad // blk_k),
                in_specs=[
                    pl.BlockSpec((1, n_head, blk_q, hs),
                                 lambda b, i, j: (b, 0, i, 0)),       # q
                    pl.BlockSpec((1, n_head, blk_k, hs), kv_index),   # k
                    pl.BlockSpec((1, n_head, blk_k, hs), kv_index),   # v
                    const_spec((C, C)),                               # W_proj^T
                    const_spec((1, C)),                               # b_proj
                ],
                out_specs=pl.BlockSpec((1, blk_q, C),
                                       lambda b, i, j: (b, i, 0)),
                scratch_shapes=[
                    pltpu.VMEM((n_head, blk_q, 1), jnp.float32),   # m (row max)
                    pltpu.VMEM((n_head, blk_q, 1), jnp.float32),   # l (row sum)
                    pltpu.VMEM((n_head, blk_q, hs), jnp.float32),  # acc
                ],
            ),
            compiler_params=pltpu.CompilerParams(
                dimension_semantics=("parallel", "parallel", "arbitrary"),
                vmem_limit_bytes=_clamp_vmem(vmem2_est(blk_q, blk_k), capacity)),
        )(q, k, v, w_proj_t, b_proj)

    try:
        out = run_attention(single_buffer_weights=True)
    except Exception:
        # pl.Buffered(1) / pipeline_mode unsupported on this jax version:
        # fall back to default double-buffered weight specs.
        out = run_attention(single_buffer_weights=False)

    if T_pad > T:
        out = out[:, :T, :]
    # TODO(synk): training-mode dropout (pltpu.prng_random_bits) not implemented.
    return out


# ----------------------------------------------------------------------------
# Pure-JAX reference mirroring the PyTorch forward (eval mode).
# ----------------------------------------------------------------------------
def _reference(x, w_qkv_t, b_qkv, w_proj_t, b_proj, n_head):
    B, T, C = x.shape
    hs = C // n_head
    qkv = x @ w_qkv_t + b_qkv[0]                              # (B, T, 3C)
    q, k, v = jnp.split(qkv, 3, axis=-1)
    q = q.reshape(B, T, n_head, hs).transpose(0, 2, 1, 3)
    k = k.reshape(B, T, n_head, hs).transpose(0, 2, 1, 3)
    v = v.reshape(B, T, n_head, hs).transpose(0, 2, 1, 3)
    s = jnp.einsum("bhqd,bhkd->bhqk", q, k) / math.sqrt(hs)
    mask = jnp.tril(jnp.ones((T, T), bool))
    s = jnp.where(mask, s, -jnp.inf)
    p = jax.nn.softmax(s, axis=-1)
    o = jnp.einsum("bhqk,bhkd->bhqd", p, v)
    o = o.transpose(0, 2, 1, 3).reshape(B, T, C)
    return o @ w_proj_t + b_proj[0]


if __name__ == "__main__":
    # Small config consistent with the module: B=2, T=8, n_embd=32, n_head=4.
    B, T, C, N_HEAD = 2, 8, 32, 4

    key = jax.random.PRNGKey(0)
    k_x, k_wq, k_bq, k_wp, k_bp = jax.random.split(key, 5)

    x = jax.random.normal(k_x, (B, T, C), dtype=jnp.float32)

    # nn.Linear-style deterministic init (uniform +/- 1/sqrt(fan_in)).
    bound = 1.0 / math.sqrt(C)
    w_qkv = jax.random.uniform(k_wq, (3 * C, C), minval=-bound, maxval=bound,
                               dtype=jnp.float32)
    b_qkv = jax.random.uniform(k_bq, (1, 3 * C), minval=-bound, maxval=bound,
                               dtype=jnp.float32)
    w_proj = jax.random.uniform(k_wp, (C, C), minval=-bound, maxval=bound,
                                dtype=jnp.float32)
    b_proj = jax.random.uniform(k_bp, (1, C), minval=-bound, maxval=bound,
                                dtype=jnp.float32)

    # Pre-transpose weights: PyTorch Linear stores (out, in); kernel wants (in, out).
    w_qkv_t = w_qkv.T
    w_proj_t = w_proj.T

    ref = _reference(x, w_qkv_t, b_qkv, w_proj_t, b_proj, N_HEAD)

    # float32 run (tolerance covers the approximate EUP reciprocal).
    out_f32 = multi_head_attention(x, w_qkv_t, b_qkv, w_proj_t, b_proj,
                                   n_head=N_HEAD)
    out_f32 = jax.block_until_ready(out_f32)
    assert out_f32.shape == (B, T, C)
    assert bool(jnp.all(jnp.isfinite(out_f32)))
    assert jnp.allclose(out_f32, ref, atol=1e-2, rtol=1e-2), \
        "f32 mismatch vs reference"

    # bf16-operand run (v6e/v7x MXU path): bf16 matmul operands, f32 softmax.
    bf = jnp.bfloat16
    out_bf16 = multi_head_attention(x.astype(bf), w_qkv_t.astype(bf),
                                    b_qkv.astype(bf), w_proj_t.astype(bf),
                                    b_proj.astype(bf), n_head=N_HEAD)
    out_bf16 = jax.block_until_ready(out_bf16)
    max_err = float(jnp.max(jnp.abs(out_bf16.astype(jnp.float32) - ref)))
    assert max_err < 0.1, f"bf16 mismatch vs reference (max abs err {max_err})"

    print("KERNEL_OK")
</pallas_src>

<mosaic_0001>
module attributes {stable_mosaic.version = 11 : i64} {
  func.func @_qkv_proj_kernel(%arg0: i32, %arg1: i32, %arg2: memref<16x32xf32, #tpu.memory_space<vmem>>, %arg3: memref<32x96xf32, #tpu.memory_space<vmem>>, %arg4: memref<1x96xf32, #tpu.memory_space<vmem>>, %arg5: memref<16x96xf32, #tpu.memory_space<vmem>>) attributes {dimension_semantics = [#tpu.dimension_semantics<parallel>, #tpu.dimension_semantics<parallel>], iteration_bounds = array<i64: 1, 1>, scalar_prefetch = 0 : i64, scratch_operands = 0 : i64, tpu.core_type = #tpu.core_type<tc>, window_params = [{transform_indices = @transform_0, window_bounds = array<i64: 16, 32>}, {transform_indices = @transform_1, window_bounds = array<i64: 32, 96>}, {transform_indices = @transform_2, window_bounds = array<i64: 1, 96>}, {transform_indices = @transform_3, window_bounds = array<i64: 16, 96>}]} {
    %c0 = arith.constant 0 : index
    %c0_0 = arith.constant 0 : index
    %0 = vector.load %arg2[%c0, %c0_0] : memref<16x32xf32, #tpu.memory_space<vmem>>, vector<16x32xf32>
    %c0_1 = arith.constant 0 : index
    %c0_2 = arith.constant 0 : index
    %1 = vector.load %arg3[%c0_1, %c0_2] : memref<32x96xf32, #tpu.memory_space<vmem>>, vector<32x96xf32>
    %cst = arith.constant dense<0.000000e+00> : vector<16x96xf32>
    %2 = tpu.matmul %0, %1, %cst {dimension_numbers = #tpu.dot_dimension_numbers<[1], [0], [0], [1], [0, 0, 1, 1], [], []>} : vector<16x32xf32>, vector<32x96xf32>, vector<16x96xf32> -> vector<16x96xf32>
    %c0_3 = arith.constant 0 : index
    %c0_4 = arith.constant 0 : index
    %3 = vector.load %arg4[%c0_3, %c0_4] : memref<1x96xf32, #tpu.memory_space<vmem>>, vector<1x96xf32>
    %4 = vector.shape_cast %3 : vector<1x96xf32> to vector<96xf32>
    %5 = vector.shape_cast %4 : vector<96xf32> to vector<1x96xf32>
    %6 = vector.broadcast %5 : vector<1x96xf32> to vector<16x96xf32>
    %7 = arith.addf %2, %6 : vector<16x96xf32>
    %c0_5 = arith.constant 0 : index
    %c0_6 = arith.constant 0 : index
    %8 = vector.load %arg5[%c0_5, %c0_6] : memref<16x96xf32, #tpu.memory_space<vmem>>, vector<16x96xf32>
    tpu.vector_store %arg5[%c0_5, %c0_6], %7 {strides = array<i32>} : memref<16x96xf32, #tpu.memory_space<vmem>>, vector<16x96xf32>,
    return
  }
  func.func @transform_0(%arg0: i32, %arg1: i32) -> (i32, i32) {
    %c0_i32 = arith.constant 0 : i32
    %c0_i32_0 = arith.constant 0 : i32
    return %arg1, %c0_i32 : i32, i32
  }
  func.func @transform_1(%arg0: i32, %arg1: i32) -> (i32, i32) {
    %c0_i32 = arith.constant 0 : i32
    %c0_i32_0 = arith.constant 0 : i32
    return %c0_i32, %arg0 : i32, i32
  }
  func.func @transform_2(%arg0: i32, %arg1: i32) -> (i32, i32) {
    %c0_i32 = arith.constant 0 : i32
    %c0_i32_0 = arith.constant 0 : i32
    return %c0_i32, %arg0 : i32, i32
  }
  func.func @transform_3(%arg0: i32, %arg1: i32) -> (i32, i32) {
    %c0_i32 = arith.constant 0 : i32
    return %arg1, %arg0 : i32, i32
  }
}

</mosaic_0001>

<llo_original>
// kernel: tpu_custom_call.1
$region0: #{tpu_custom_call.1}
  #allocation0 [shape = 'u32[]', space=smem, size = 0x4, offset = 0x4, fixed_abs, tag = 'smem constant byte address 0x4 - core index']
  #allocation1 [shape = 'u32[72,128]{1,0:T(1,128)}', space=vmem, size = 0x9000, scoped, tag = 'internal scratch']
  %s0 = inlined_call_operand.hbm [shape: f32[16,32], index: 0, kind: input, shape index: {}]
  %s1 = inlined_call_operand.hbm [shape: f32[32,96], index: 1, kind: input, shape index: {}]
  %s2 = inlined_call_operand.vmem [shape: f32[1,96], index: 2, kind: input, shape index: {}]
  %s3 = inlined_call_operand.hbm [shape: f32[16,96], index: 3, kind: output, shape index: {}]
  %s4 = sld [smem:[#allocation0]]
  $region30: #{tpu_custom_call.1} parent=0
    _
  %s6 = ssub.s32 1, %s4
  %s7 = scalar_select 0, %s6, %s4
  $region1: #{tpu_custom_call.1} parent=0
    #allocation2 [shape = 'u8[8192]{0}', space=vmem, size = 0x2000, scoped, tag = 'input window, operand 0, single buffered']
    #allocation3 [shape = 's32[1]{0}', space=sflag, size = 0x4, scoped, tag = 'scoped memory for tpu_custom_call.1']
    #allocation4 [shape = 's32[1]{0}', space=sflag, size = 0x4, scoped, tag = 'scoped memory for tpu_custom_call.1']
    #allocation5 [shape = 'u8[16384]{0}', space=vmem, size = 0x4000, scoped, tag = 'input window, operand 1, single buffered']
    #allocation6 [shape = 's32[1]{0}', space=sflag, size = 0x4, scoped, tag = 'scoped memory for tpu_custom_call.1']
    #allocation7 [shape = 'u8[8192]{0}', space=vmem, size = 0x2000, scoped, tag = 'output window, operand 0, single buffered']
    %8 = vsyncpa [#allocation3], 0
    %9 = vsyncpa [#allocation6], 0
    %10 = vsyncpa [#allocation4], 0
    // Predicated region
    $region2: #{tpu_custom_call.1} parent=1 // pred_check
      _
    $region3: #{tpu_custom_call.1} parent=1 // pred_check_branch
      %12 = sbr.rel (0) target = $region5
    $region4: #{tpu_custom_call.1} parent=1 // pred_region
      %14 = vsyncadd [#allocation3], 0
      %s15 = sshll.u32 %s0, 4
      %s16 = int_to_ptr.hbm [resolvable:$true] %s15
      %s17 = sshll.u32 [#allocation2], 4
      %s18 = int_to_ptr.vmem [resolvable:$true] %s17
      %23 = dma.hbm_to_vmem [thread:$0]  %s16, 256, %s18, [#allocation3], 128, 128, 8
    $region5: #{tpu_custom_call.1} parent=1 // pred_fallthru
      _
    // Predicated region
    $region6: #{tpu_custom_call.1} parent=1 // pred_check
      _
    $region7: #{tpu_custom_call.1} parent=1 // pred_check_branch
      %25 = sbr.rel (0) target = $region9
    $region8: #{tpu_custom_call.1} parent=1 // pred_region
      %27 = vsyncadd [#allocation6], 0
      %s28 = sshll.u32 %s1, 4
      %s29 = int_to_ptr.hbm [resolvable:$true] %s28
      %s30 = sshll.u32 [#allocation5], 4
      %s31 = int_to_ptr.vmem [resolvable:$true] %s30
      %36 = dma.hbm_to_vmem [thread:$0]  %s29, 512, %s31, [#allocation6], 128, 128, 8
    $region9: #{tpu_custom_call.1} parent=1 // pred_fallthru
      _
    // Predicated region
    $region10: #{tpu_custom_call.1} parent=1 // pred_check
      _
    $region11: #{tpu_custom_call.1} parent=1 // pred_check_branch
      %38 = sbr.rel (0) target = $region13
    $region12: #{tpu_custom_call.1} parent=1 // pred_region
      _
    $region13: #{tpu_custom_call.1} parent=1 // pred_fallthru
      _
    // Predicated region
    $region14: #{tpu_custom_call.1} parent=1 // pred_check
      _
    $region15: #{tpu_custom_call.1} parent=1 // pred_check_branch
      %40 = sbr.rel (0) target = $region17
    $region16: #{tpu_custom_call.1} parent=1 // pred_region
      %42 = dma.done [#allocation3], 256
    $region17: #{tpu_custom_call.1} parent=1 // pred_fallthru
      _
    // Predicated region
    $region18: #{tpu_custom_call.1} parent=1 // pred_check
      _
    $region19: #{tpu_custom_call.1} parent=1 // pred_check_branch
      %44 = sbr.rel (0) target = $region21
    $region20: #{tpu_custom_call.1} parent=1 // pred_region
      %46 = dma.done [#allocation6], 512
    $region21: #{tpu_custom_call.1} parent=1 // pred_fallthru
      _
    %v47 = vld [vmem:[#allocation2] sm:$0xff]
    %v48 = vld [vmem:[#allocation2 + $0x8] sm:$0xff]
    %v49 = vld [vmem:[#allocation5] sm:$0xff]
    %v50 = vld [vmem:[#allocation5 + $0x8] sm:$0xff]
    %v51 = vld [vmem:[#allocation5 + $0x10] sm:$0xff]
    %v52 = vld [vmem:[#allocation5 + $0x18] sm:$0xff]
    %v53 = vld [vmem:[%s2] sm:$0x1]
    %v55 = vperm.slane %v53, 0
    %vm57 = vcmask 261120
    %v59 = vsel %vm57, %v47, 0
    %v62 = vsel %vm57, %v48, 0
    %64 = vmatpush.msra.mxu0 0.0
    %65 = vmatpush.msra.mxu0 0.0
    %66 = vmatpush.msra.mxu0 0.0
    %67 = vmatpush.msra.mxu0 0.0
    %68 = vmatpush.msra.mxu0 0.0
    %69 = vmatpush.msra.mxu0 0.0
    %70 = vmatpush.msra.mxu0 0.0
    %71 = vmatpush.msra.mxu0 0.0
    %72 = vmatpush.msra.mxu0 0.0
    %73 = vmatpush.msra.mxu0 0.0
    %74 = vmatpush.msra.mxu0 0.0
    %75 = vmatpush.msra.mxu0 0.0
    %76 = vmatpush.msra.mxu0 %v52
    %77 = vmatpush.msra.mxu0 %v51
    %78 = vmatpush.msra.mxu0 %v50
    %79 = vmatpush.msra.mxu0 %v49
    %80 = vmatmul.f32.gmra.mxu0 %v59
    %v81 = vpop.f32.mrf.mxu0
    %v82 = vadd.f32 %v55, %v81
    %83 = vmatmul.f32.gmra.mxu0 %v62
    %v84 = vpop.f32.mrf.mxu0
    %v85 = vadd.f32 %v55, %v84
    %86 = vdwg.mxu0
    %vm87 = vcmask 785408
    %88 = vst.msk [vmem:[#allocation7] sm:$0xff] %vm87, %v82
    %89 = vst.msk [vmem:[#allocation7 + $0x8] sm:$0xff] %vm87, %v85
    // Predicated region
    $region22: #{tpu_custom_call.1} parent=1 // pred_check
      _
    $region23: #{tpu_custom_call.1} parent=1 // pred_check_branch
      %91 = sbr.rel (0) target = $region25
    $region24: #{tpu_custom_call.1} parent=1 // pred_region
      %93 = vsyncadd [#allocation4], 0
      %s94 = sshll.u32 [#allocation7], 4
      %s95 = int_to_ptr.vmem [resolvable:$true] %s94
      %s96 = sshll.u32 %s3, 4
      %s97 = int_to_ptr.hbm [resolvable:$true] %s96
      %102 = dma.vmem_to_hbm [thread:$0]  %s95, 256, %s97, [#allocation4], 128, 128, 8
    $region25: #{tpu_custom_call.1} parent=1 // pred_fallthru
      _
    // Predicated region
    $region26: #{tpu_custom_call.1} parent=1 // pred_check
      _
    $region27: #{tpu_custom_call.1} parent=1 // pred_check_branch
      %104 = sbr.rel (0) target = $region29
    $region28: #{tpu_custom_call.1} parent=1 // pred_region
      %106 = dma.done [#allocation4], 256
    $region29: #{tpu_custom_call.1} parent=1 // pred_fallthru
      _
    %107 = vsyncpa [#allocation3], 1
    %108 = vsyncpa [#allocation6], 1
    %109 = vsyncpa [#allocation4], 1

</llo_original>
